<compile_context>
chip_gen: v7x
topology: tpu7x:2x2x1
jax: 0.10.0
libtpu: 0.0.40
codegen_flags: <defaults>
</compile_context>

<pallas_src>
import math

import jax
import jax.numpy as jnp
from jax.experimental import pallas as pl
from jax.experimental.pallas import tpu as pltpu


# ----------------------------------------------------------------------------
# Helpers.
# ----------------------------------------------------------------------------
def _round_up(x, m):
    return -(-x // m) * m


def _cdiv(a, b):
    return -(-a // b)


def _vmem_capacity_bytes():
    """Physical VMEM of the current generation (conservative fallback)."""
    try:
        return int(pltpu.get_tpu_info().vmem_capacity_bytes)
    except Exception:
        return 64 * 1024 * 1024        # v7x per-core size; safe floor everywhere


def _choose_o_tile(O):
    """Out-channel tile: full O when small, else a 128-aligned divisor."""
    if O <= 256:
        return O
    for to in (256, 128):
        if O % to == 0:
            return to
    return O


def _plan_tiles(*, H, C, K, stride, padding, dilation, H_out, W_pad,
                ckk_pad, TO, has_bias):
    """Pick TH (output rows per grid step) under a generation-aware VMEM budget.

    Returns (TH, num_tiles, TM, H_tot, Lflat, vmem_est)."""
    budget = _vmem_capacity_bytes() - (8 << 20)

    def plan(th):
        tm = _round_up(th * W_pad, 128)
        ntiles = _cdiv(H_out, th)
        # Furthest flat-input element touched by any (tile, tap) read.
        max_base = (((ntiles - 1) * th * stride + (K - 1) * dilation) * W_pad
                    + (K - 1) * dilation)
        max_idx = max_base + stride * (tm - 1)
        rows_needed = _cdiv(max_idx + 1, W_pad)
        h_tot = max(H + 2 * padding, rows_needed)
        lflat = h_tot * W_pad
        est = (2 * C * lflat * 2                 # double-buffered bf16 input block
               + 2 * TO * ckk_pad * 2            # bf16 weight block
               + (2 * TO * 4 if has_bias else 0)
               + 2 * TO * tm * 4                 # double-buffered f32 output block
               + ckk_pad * tm * 2                # bf16 patch-slab scratch
               + TO * tm * 4                     # f32 matmul result
               + (2 << 20))                      # headroom
        return tm, ntiles, h_tot, lflat, est

    # Whole image per step when it fits (fully static in-kernel addressing).
    tm, nt, h_tot, lflat, est = plan(H_out)
    if est <= budget:
        return H_out, 1, tm, h_tot, lflat, est
    # Prefer divisors of H_out (no wasted bottom row-tiles).
    for th in range(H_out - 1, 0, -1):
        if H_out % th:
            continue
        tm, nt, h_tot, lflat, est = plan(th)
        if est <= budget:
            return th, nt, tm, h_tot, lflat, est
    # Largest tile that fits, dividing or not.
    for th in range(H_out, 0, -1):
        tm, nt, h_tot, lflat, est = plan(th)
        if est <= budget:
            return th, nt, tm, h_tot, lflat, est
    # TODO(synk): for images whose resident input block alone exceeds VMEM,
    # switch the input spec to memory_space=pl.ANY + manual row-window DMA.
    tm, nt, h_tot, lflat, est = plan(1)
    return 1, nt, tm, h_tot, lflat, est


# ----------------------------------------------------------------------------
# Fused im2col + matmul kernel.
# ----------------------------------------------------------------------------
def _make_fused_conv_kernel(*, K, C, stride, dilation, W_pad, TH, TM,
                            ckk, ckk_pad, num_tiles, num_o, has_bias):
    def kernel(*refs):
        if has_bias:
            x_ref, w_ref, b_ref, o_ref, p_ref = refs
        else:
            x_ref, w_ref, o_ref, p_ref = refs
            b_ref = None

        # --- zero the padded contraction rows once per batch element --------
        # The slab scratch persists across the (row-tile, O-tile) axes, which
        # are both "arbitrary"; only the batch axis is "parallel", so every
        # core sees (i == 0, o == 0) for each batch element it owns.
        if ckk_pad != ckk:
            def zero_pads():
                p_ref[pl.ds(ckk, ckk_pad - ckk), :] = jnp.zeros(
                    (ckk_pad - ckk, TM), p_ref.dtype)
            if num_tiles == 1 and num_o == 1:
                zero_pads()
            else:
                pl.when((pl.program_id(1) == 0) & (pl.program_id(2) == 0))(zero_pads)

        # --- fused im2col: one lane-dense (C, TM) load + store per tap ------
        # Slab row index = (kh*K + kw)*C + c (weight was permuted to this
        # column order at init).  Slab column j = r*W_pad + w' maps to output
        # pixel (row0 + r, w'); columns with w' >= W_out (and TM padding) are
        # harmless overcompute discarded by the wrapper.
        def fill_slab():
            if num_tiles == 1:
                base0 = 0                                  # fully static addressing
            else:
                base0 = pl.program_id(1) * (TH * stride * W_pad)
            for kh in range(K):
                for kw in range(K):
                    tap = kh * K + kw
                    off = kh * dilation * W_pad + kw * dilation
                    if stride == 1:
                        chunk = x_ref[0, :, pl.ds(base0 + off, TM)]
                    else:
                        # TODO(synk): stride>1 overcomputes ~stride x columns;
                        # a per-image width pre-compaction would remove that.
                        chunk = x_ref[0, :, pl.ds(base0 + off, TM, stride)]
                    p_ref[pl.ds(tap * C, C), :] = chunk

        if num_o == 1:
            fill_slab()
        else:
            # O is the innermost grid axis: fill once per (n, row-tile),
            # reuse the slab for every O tile.
            pl.when(pl.program_id(2) == 0)(fill_slab)

        # --- lane-dense MXU matmul: (TO, ckk_pad) @ (ckk_pad, TM) -----------
        acc = jnp.dot(w_ref[...], p_ref[...],
                      preferred_element_type=jnp.float32)
        if has_bias:
            acc = acc + b_ref[...]                         # (TO, 1) broadcast
        o_ref[0] = acc.astype(o_ref.dtype)

    return kernel


def _fused_conv2d_pallas(xf, w_packed, b_packed, *, N, C, O, K, stride,
                         dilation, W_pad, TH, num_tiles, TM, TO, num_o,
                         has_bias, ckk, ckk_pad, vmem_est, out_dtype):
    """xf: (N, C, Lflat) bf16 flattened padded input.

    Returns (N, O, num_tiles*TM) in out_dtype (columns over padded width)."""
    Lflat = xf.shape[-1]

    kernel = _make_fused_conv_kernel(
        K=K, C=C, stride=stride, dilation=dilation, W_pad=W_pad, TH=TH, TM=TM,
        ckk=ckk, ckk_pad=ckk_pad, num_tiles=num_tiles, num_o=num_o,
        has_bias=has_bias)

    in_specs = [
        # Flattened padded input for batch n, resident across row/O tiles.
        pl.BlockSpec((1, C, Lflat), lambda n, i, o: (n, 0, 0)),
        # Packed (TO, ckk_pad) bf16 weight tile.
        pl.BlockSpec((TO, ckk_pad), lambda n, i, o: (o, 0)),
    ]
    args = [xf, w_packed]
    if has_bias:
        in_specs.append(pl.BlockSpec((TO, 1), lambda n, i, o: (o, 0)))
        args.append(b_packed)

    capacity = _vmem_capacity_bytes()
    # Always set the scoped limit (v5e default is only 16 MiB); never exceed
    # the generation's physical VMEM.
    vmem_limit = int(min(max(vmem_est * 5 // 4, 32 << 20), capacity - (2 << 20)))

    out_itemsize = jnp.dtype(out_dtype).itemsize
    out = pl.pallas_call(
        kernel,
        out_shape=jax.ShapeDtypeStruct((N, O, num_tiles * TM), out_dtype),
        grid_spec=pltpu.PrefetchScalarGridSpec(
            num_scalar_prefetch=0,
            grid=(N, num_tiles, num_o),
            in_specs=in_specs,
            out_specs=pl.BlockSpec((1, TO, TM), lambda n, i, o: (n, o, i)),
            scratch_shapes=[pltpu.VMEM((ckk_pad, TM), jnp.bfloat16)],
        ),
        compiler_params=pltpu.CompilerParams(
            # Batch only is parallel: keeps the once-per-batch slab-pad zeroing
            # and slab reuse across O tiles megacore-safe.
            dimension_semantics=("parallel", "arbitrary", "arbitrary"),
            vmem_limit_bytes=vmem_limit),
        cost_estimate=pl.CostEstimate(
            flops=2 * N * num_tiles * TM * ckk_pad * O,
            transcendentals=0,
            bytes_accessed=int(xf.size * 2 + w_packed.size * 2
                               + (O * 4 if has_bias else 0)
                               + N * O * num_tiles * TM * out_itemsize)),
    )(*args)
    return out


# ----------------------------------------------------------------------------
# Module-equivalent wrapper.
# ----------------------------------------------------------------------------
class CustomConv2DPallas:
    """JAX/Pallas equivalent of the PyTorch CustomConv2D (square kernels only)."""

    def __init__(self, in_channels, out_channels, kernel_size, stride=1,
                 padding=0, dilation=1, bias=True, key=None,
                 out_dtype=jnp.float32):
        self.in_channels = int(in_channels)
        self.out_channels = int(out_channels)
        self.kernel_size = int(kernel_size)
        self.stride = int(stride)
        self.padding = int(padding)
        self.dilation = int(dilation)
        self.has_bias = bool(bias)
        self.out_dtype = jnp.dtype(out_dtype)

        self._ckk = self.in_channels * self.kernel_size * self.kernel_size
        # bf16 sublane packing wants a multiple of 16; once the contraction is
        # large enough, pad to 128 so MXU feeds are full width.
        if self._ckk >= 96:
            self._ckk_pad = _round_up(self._ckk, 128)
        else:
            self._ckk_pad = _round_up(self._ckk, 16)

        fan_in = self._ckk
        # kaiming_uniform_(a=sqrt(5)) on (O, fan_in) -> U(-1/sqrt(fan_in), 1/sqrt(fan_in))
        bound = 1.0 / math.sqrt(fan_in)
        if key is None:
            key = jax.random.PRNGKey(42)
        weight = jax.random.uniform(key, (out_channels, fan_in),
                                    dtype=jnp.float32, minval=-bound, maxval=bound)
        b = jnp.zeros((out_channels,), jnp.float32) if self.has_bias else None
        self.load_params(weight, b)

    def load_params(self, weight, bias=None):
        """Store parameters and precompute the kernel-consumed layouts (once)."""
        O, C, K = self.out_channels, self.in_channels, self.kernel_size
        self.weight = jnp.asarray(weight, jnp.float32).reshape(O, C * K * K)
        # F.unfold column order is c*K*K + kh*K + kw; the kernel builds patch
        # rows as (kh*K + kw)*C + c, so permute once here, zero-pad the
        # contraction dim, and cast to bf16 for the MXU.
        w_perm = (self.weight.reshape(O, C, K, K)
                  .transpose(0, 2, 3, 1).reshape(O, K * K * C))
        if self._ckk_pad != self._ckk:
            w_perm = jnp.pad(w_perm, ((0, 0), (0, self._ckk_pad - self._ckk)))
        self._w_packed = w_perm.astype(jnp.bfloat16)
        if self.has_bias:
            self.bias = jnp.asarray(bias, jnp.float32).reshape(O)
            self._b_packed = self.bias.reshape(O, 1)
        else:
            self.bias = None
            self._b_packed = None

    def get_output_size(self, input_size):
        return (input_size + 2 * self.padding
                - self.dilation * (self.kernel_size - 1) - 1) // self.stride + 1

    def __call__(self, x):
        if x.ndim == 3:
            x = x[None]
        elif x.ndim == 2:
            x = x[None, None]
        elif x.ndim != 4:
            raise ValueError(
                f"Input tensor must have 2, 3 or 4 dimensions. Got {x.ndim}.")

        N, C, H, W = x.shape
        K, s, p, d = self.kernel_size, self.stride, self.padding, self.dilation
        O = self.out_channels
        H_out = self.get_output_size(H)
        W_out = self.get_output_size(W)
        W_pad = W + 2 * p

        TO = _choose_o_tile(O)
        num_o = O // TO
        TH, num_tiles, TM, H_tot, Lflat, vmem_est = _plan_tiles(
            H=H, C=C, K=K, stride=s, padding=p, dilation=d,
            H_out=H_out, W_pad=W_pad, ckk_pad=self._ckk_pad, TO=TO,
            has_bias=self.has_bias)

        # One wrapper pad (includes the bottom rows needed so every flat read
        # of length TM stays in bounds), then a free metadata reshape.
        pad_bottom = H_tot - H - p
        xp = jnp.pad(x.astype(jnp.bfloat16),
                     ((0, 0), (0, 0), (p, pad_bottom), (p, p)))
        xf = xp.reshape(N, C, H_tot * W_pad)
        # TODO(synk): folding the spatial zero-pad fully into the kernel would
        # remove this one input-sized HBM pass.

        out = _fused_conv2d_pallas(
            xf, self._w_packed, self._b_packed,
            N=N, C=C, O=O, K=K, stride=s, dilation=d, W_pad=W_pad,
            TH=TH, num_tiles=num_tiles, TM=TM, TO=TO, num_o=num_o,
            has_bias=self.has_bias, ckk=self._ckk, ckk_pad=self._ckk_pad,
            vmem_est=vmem_est, out_dtype=self.out_dtype)

        # (N, O, num_tiles*TM): columns are (row, col) over the padded width.
        out = out.reshape(N, O, num_tiles, TM)[:, :, :, :TH * W_pad]
        out = out.reshape(N, O, num_tiles * TH, W_pad)[:, :, :H_out, :W_out]
        return out


if __name__ == "__main__":
    key = jax.random.PRNGKey(0)
    kx, kw_, kb = jax.random.split(key, 3)

    # Small shapes: batch=2, in_channels=4, spatial=16, out_channels=8, k=3.
    x = jax.random.normal(kx, (2, 4, 16, 16), dtype=jnp.float32)

    conv = CustomConv2DPallas(in_channels=4, out_channels=8, kernel_size=3,
                              stride=1, padding=1, dilation=1, bias=True, key=kw_)
    # Non-zero bias so the bias path is exercised.
    conv.load_params(conv.weight, 0.1 * jax.random.normal(kb, (8,), jnp.float32))

    y = jax.block_until_ready(conv(x))
    assert y.shape == (2, 8, 16, 16), y.shape

    # Reference: XLA conv with the same bf16 operand rounding + f32 accumulation.
    w4 = conv.weight.reshape(8, 4, 3, 3).astype(jnp.bfloat16)
    y_ref = jax.lax.conv_general_dilated(
        x.astype(jnp.bfloat16), w4, window_strides=(1, 1),
        padding=((1, 1), (1, 1)), rhs_dilation=(1, 1),
        dimension_numbers=("NCHW", "OIHW", "NCHW"),
        preferred_element_type=jnp.float32)
    y_ref = y_ref + conv.bias.reshape(1, 8, 1, 1)

    err = float(jnp.max(jnp.abs(y - y_ref)))
    assert jnp.allclose(y, y_ref, atol=1e-2, rtol=1e-2), f"max abs err {err}"

    print("KERNEL_OK")
</pallas_src>

<mosaic_0001>
module attributes {stable_mosaic.version = 11 : i64} {
  func.func @kernel(%arg0: i32, %arg1: i32, %arg2: i32, %arg3: memref<1x4x432xbf16, #tpu.memory_space<vmem>>, %arg4: memref<8x48xbf16, #tpu.memory_space<vmem>>, %arg5: memref<8x1xf32, #tpu.memory_space<vmem>>, %arg6: memref<1x8x384xf32, #tpu.memory_space<vmem>>, %arg7: memref<48x384xbf16, #tpu.memory_space<vmem>>) attributes {dimension_semantics = [#tpu.dimension_semantics<parallel>, #tpu.dimension_semantics<arbitrary>, #tpu.dimension_semantics<arbitrary>], iteration_bounds = array<i64: 2, 1, 1>, scalar_prefetch = 0 : i64, scratch_operands = 1 : i64, tpu.core_type = #tpu.core_type<tc>, window_params = [{transform_indices = @transform_0, window_bounds = array<i64: 1, 4, 432>}, {transform_indices = @transform_1, window_bounds = array<i64: 8, 48>}, {transform_indices = @transform_2, window_bounds = array<i64: 8, 1>}, {transform_indices = @transform_3, window_bounds = array<i64: 1, 8, 384>}]} {
    %cst = arith.constant 0.000000e+00 : bf16
    %0 = vector.broadcast %cst : bf16 to vector<12x384xbf16>
    %c36 = arith.constant 36 : index
    %c0 = arith.constant 0 : index
    %1 = vector.load %arg7[%c36, %c0] : memref<48x384xbf16, #tpu.memory_space<vmem>>, vector<12x384xbf16>
    tpu.vector_store %arg7[%c36, %c0], %0 {strides = array<i32>} : memref<48x384xbf16, #tpu.memory_space<vmem>>, vector<12x384xbf16>,
    %c0_0 = arith.constant 0 : index
    %c0_1 = arith.constant 0 : index
    %c0_2 = arith.constant 0 : index
    %2 = vector.load %arg3[%c0_0, %c0_1, %c0_2] : memref<1x4x432xbf16, #tpu.memory_space<vmem>>, vector<1x4x384xbf16>
    %3 = vector.shape_cast %2 : vector<1x4x384xbf16> to vector<4x384xbf16>
    %c0_3 = arith.constant 0 : index
    %c0_4 = arith.constant 0 : index
    %4 = vector.load %arg7[%c0_3, %c0_4] : memref<48x384xbf16, #tpu.memory_space<vmem>>, vector<4x384xbf16>
    tpu.vector_store %arg7[%c0_3, %c0_4], %3 {strides = array<i32>} : memref<48x384xbf16, #tpu.memory_space<vmem>>, vector<4x384xbf16>,
    %c0_5 = arith.constant 0 : index
    %c0_6 = arith.constant 0 : index
    %c1 = arith.constant 1 : index
    %5 = vector.load %arg3[%c0_5, %c0_6, %c1] : memref<1x4x432xbf16, #tpu.memory_space<vmem>>, vector<1x4x384xbf16>
    %6 = vector.shape_cast %5 : vector<1x4x384xbf16> to vector<4x384xbf16>
    %c4 = arith.constant 4 : index
    %c0_7 = arith.constant 0 : index
    %7 = vector.load %arg7[%c4, %c0_7] : memref<48x384xbf16, #tpu.memory_space<vmem>>, vector<4x384xbf16>
    tpu.vector_store %arg7[%c4, %c0_7], %6 {strides = array<i32>} : memref<48x384xbf16, #tpu.memory_space<vmem>>, vector<4x384xbf16>,
    %c0_8 = arith.constant 0 : index
    %c0_9 = arith.constant 0 : index
    %c2 = arith.constant 2 : index
    %8 = vector.load %arg3[%c0_8, %c0_9, %c2] : memref<1x4x432xbf16, #tpu.memory_space<vmem>>, vector<1x4x384xbf16>
    %9 = vector.shape_cast %8 : vector<1x4x384xbf16> to vector<4x384xbf16>
    %c8 = arith.constant 8 : index
    %c0_10 = arith.constant 0 : index
    %10 = vector.load %arg7[%c8, %c0_10] : memref<48x384xbf16, #tpu.memory_space<vmem>>, vector<4x384xbf16>
    tpu.vector_store %arg7[%c8, %c0_10], %9 {strides = array<i32>} : memref<48x384xbf16, #tpu.memory_space<vmem>>, vector<4x384xbf16>,
    %c0_11 = arith.constant 0 : index
    %c0_12 = arith.constant 0 : index
    %c18 = arith.constant 18 : index
    %11 = vector.load %arg3[%c0_11, %c0_12, %c18] : memref<1x4x432xbf16, #tpu.memory_space<vmem>>, vector<1x4x384xbf16>
    %12 = vector.shape_cast %11 : vector<1x4x384xbf16> to vector<4x384xbf16>
    %c12 = arith.constant 12 : index
    %c0_13 = arith.constant 0 : index
    %13 = vector.load %arg7[%c12, %c0_13] : memref<48x384xbf16, #tpu.memory_space<vmem>>, vector<4x384xbf16>
    tpu.vector_store %arg7[%c12, %c0_13], %12 {strides = array<i32>} : memref<48x384xbf16, #tpu.memory_space<vmem>>, vector<4x384xbf16>,
    %c0_14 = arith.constant 0 : index
    %c0_15 = arith.constant 0 : index
    %c19 = arith.constant 19 : index
    %14 = vector.load %arg3[%c0_14, %c0_15, %c19] : memref<1x4x432xbf16, #tpu.memory_space<vmem>>, vector<1x4x384xbf16>
    %15 = vector.shape_cast %14 : vector<1x4x384xbf16> to vector<4x384xbf16>
    %c16 = arith.constant 16 : index
    %c0_16 = arith.constant 0 : index
    %16 = vector.load %arg7[%c16, %c0_16] : memref<48x384xbf16, #tpu.memory_space<vmem>>, vector<4x384xbf16>
    tpu.vector_store %arg7[%c16, %c0_16], %15 {strides = array<i32>} : memref<48x384xbf16, #tpu.memory_space<vmem>>, vector<4x384xbf16>,
    %c0_17 = arith.constant 0 : index
    %c0_18 = arith.constant 0 : index
    %c20 = arith.constant 20 : index
    %17 = vector.load %arg3[%c0_17, %c0_18, %c20] : memref<1x4x432xbf16, #tpu.memory_space<vmem>>, vector<1x4x384xbf16>
    %18 = vector.shape_cast %17 : vector<1x4x384xbf16> to vector<4x384xbf16>
    %c20_19 = arith.constant 20 : index
    %c0_20 = arith.constant 0 : index
    %19 = vector.load %arg7[%c20_19, %c0_20] : memref<48x384xbf16, #tpu.memory_space<vmem>>, vector<4x384xbf16>
    tpu.vector_store %arg7[%c20_19, %c0_20], %18 {strides = array<i32>} : memref<48x384xbf16, #tpu.memory_space<vmem>>, vector<4x384xbf16>,
    %c0_21 = arith.constant 0 : index
    %c0_22 = arith.constant 0 : index
    %c36_23 = arith.constant 36 : index
    %20 = vector.load %arg3[%c0_21, %c0_22, %c36_23] : memref<1x4x432xbf16, #tpu.memory_space<vmem>>, vector<1x4x384xbf16>
    %21 = vector.shape_cast %20 : vector<1x4x384xbf16> to vector<4x384xbf16>
    %c24 = arith.constant 24 : index
    %c0_24 = arith.constant 0 : index
    %22 = vector.load %arg7[%c24, %c0_24] : memref<48x384xbf16, #tpu.memory_space<vmem>>, vector<4x384xbf16>
    tpu.vector_store %arg7[%c24, %c0_24], %21 {strides = array<i32>} : memref<48x384xbf16, #tpu.memory_space<vmem>>, vector<4x384xbf16>,
    %c0_25 = arith.constant 0 : index
    %c0_26 = arith.constant 0 : index
    %c37 = arith.constant 37 : index
    %23 = vector.load %arg3[%c0_25, %c0_26, %c37] : memref<1x4x432xbf16, #tpu.memory_space<vmem>>, vector<1x4x384xbf16>
    %24 = vector.shape_cast %23 : vector<1x4x384xbf16> to vector<4x384xbf16>
    %c28 = arith.constant 28 : index
    %c0_27 = arith.constant 0 : index
    %25 = vector.load %arg7[%c28, %c0_27] : memref<48x384xbf16, #tpu.memory_space<vmem>>, vector<4x384xbf16>
    tpu.vector_store %arg7[%c28, %c0_27], %24 {strides = array<i32>} : memref<48x384xbf16, #tpu.memory_space<vmem>>, vector<4x384xbf16>,
    %c0_28 = arith.constant 0 : index
    %c0_29 = arith.constant 0 : index
    %c38 = arith.constant 38 : index
    %26 = vector.load %arg3[%c0_28, %c0_29, %c38] : memref<1x4x432xbf16, #tpu.memory_space<vmem>>, vector<1x4x384xbf16>
    %27 = vector.shape_cast %26 : vector<1x4x384xbf16> to vector<4x384xbf16>
    %c32 = arith.constant 32 : index
    %c0_30 = arith.constant 0 : index
    %28 = vector.load %arg7[%c32, %c0_30] : memref<48x384xbf16, #tpu.memory_space<vmem>>, vector<4x384xbf16>
    tpu.vector_store %arg7[%c32, %c0_30], %27 {strides = array<i32>} : memref<48x384xbf16, #tpu.memory_space<vmem>>, vector<4x384xbf16>,
    %c0_31 = arith.constant 0 : index
    %c0_32 = arith.constant 0 : index
    %29 = vector.load %arg4[%c0_31, %c0_32] : memref<8x48xbf16, #tpu.memory_space<vmem>>, vector<8x48xbf16>
    %c0_33 = arith.constant 0 : index
    %c0_34 = arith.constant 0 : index
    %30 = vector.load %arg7[%c0_33, %c0_34] : memref<48x384xbf16, #tpu.memory_space<vmem>>, vector<48x384xbf16>
    %cst_35 = arith.constant dense<0.000000e+00> : vector<8x384xf32>
    %31 = tpu.matmul %29, %30, %cst_35 {dimension_numbers = #tpu.dot_dimension_numbers<[1], [0], [0], [1], [0, 0, 1, 1], [], []>} : vector<8x48xbf16>, vector<48x384xbf16>, vector<8x384xf32> -> vector<8x384xf32>
    %c0_36 = arith.constant 0 : index
    %c0_37 = arith.constant 0 : index
    %32 = vector.load %arg5[%c0_36, %c0_37] : memref<8x1xf32, #tpu.memory_space<vmem>>, vector<8x1xf32>
    %33 = vector.broadcast %32 : vector<8x1xf32> to vector<8x384xf32>
    %34 = arith.addf %31, %33 : vector<8x384xf32>
    %c0_38 = arith.constant 0 : index
    %c0_39 = arith.constant 0 : index
    %c0_40 = arith.constant 0 : index
    %35 = vector.load %arg6[%c0_38, %c0_39, %c0_40] : memref<1x8x384xf32, #tpu.memory_space<vmem>>, vector<1x8x384xf32>
    %36 = vector.shape_cast %35 : vector<1x8x384xf32> to vector<8x384xf32>
    %37 = vector.shape_cast %34 : vector<8x384xf32> to vector<1x8x384xf32>
    tpu.vector_store %arg6[%c0_38, %c0_39, %c0_40], %37 {strides = array<i32>} : memref<1x8x384xf32, #tpu.memory_space<vmem>>, vector<1x8x384xf32>,
    return
  }
  func.func @transform_0(%arg0: i32, %arg1: i32, %arg2: i32) -> (i32, i32, i32) {
    %c0_i32 = arith.constant 0 : i32
    %c0_i32_0 = arith.constant 0 : i32
    %c0_i32_1 = arith.constant 0 : i32
    return %arg0, %c0_i32, %c0_i32_0 : i32, i32, i32
  }
  func.func @transform_1(%arg0: i32, %arg1: i32, %arg2: i32) -> (i32, i32) {
    %c0_i32 = arith.constant 0 : i32
    %c0_i32_0 = arith.constant 0 : i32
    return %arg2, %c0_i32 : i32, i32
  }
  func.func @transform_2(%arg0: i32, %arg1: i32, %arg2: i32) -> (i32, i32) {
    %c0_i32 = arith.constant 0 : i32
    %c0_i32_0 = arith.constant 0 : i32
    return %arg2, %c0_i32 : i32, i32
  }
  func.func @transform_3(%arg0: i32, %arg1: i32, %arg2: i32) -> (i32, i32, i32) {
    %c0_i32 = arith.constant 0 : i32
    return %arg0, %arg2, %arg1 : i32, i32, i32
  }
}

</mosaic_0001>

<llo_original>
// kernel: tpu_custom_call.1
$region0: #{tpu_custom_call.1}
  #allocation0 [shape = 'u32[]', space=smem, size = 0x4, offset = 0x4, fixed_abs, tag = 'smem constant byte address 0x4 - core index']
  #allocation1 [shape = 'u32[144,128]{1,0:T(1,128)}', space=vmem, size = 0x12000, scoped, tag = 'internal scratch']
  #allocation2 [shape = 'bf16[48,384]{1,0:T(16,128)(2,1)}', space=vmem, size = 0x9000, scoped, tag = 'scratch operand']
  %s0 = inlined_call_operand.hbm [shape: bf16[2,4,432], index: 0, kind: input, shape index: {}]
  %s1 = inlined_call_operand.vmem [shape: bf16[8,48], index: 1, kind: input, shape index: {}]
  %s2 = inlined_call_operand.vmem [shape: f32[8,1], index: 2, kind: input, shape index: {}]
  %s3 = inlined_call_operand.hbm [shape: f32[2,8,384], index: 3, kind: output, shape index: {}]
  %s4 = sld [smem:[#allocation0]]
  $region49: #{tpu_custom_call.1} parent=0
    _
  %s6 = ssub.s32 1, %s4
  %s7 = scalar_select 0, %s6, %s4
  $region1: #{tpu_custom_call.1} parent=0
    #allocation3 [shape = 'u8[8192]{0}', space=vmem, size = 0x2000, scoped, tag = 'input window, operand 0']
    #allocation4 [shape = 's32[2]{0}', space=sflag, size = 0x8, scoped, tag = 'scoped memory for tpu_custom_call.1']
    #allocation5 [shape = 's32[2]{0}', space=sflag, size = 0x8, scoped, tag = 'scoped memory for tpu_custom_call.1']
    #allocation6 [shape = 'u8[24576]{0}', space=vmem, size = 0x6000, scoped, tag = 'output window, operand 0']
    %8 = vsyncpa [#allocation4], 0
    %s9 = scalar_lea.sflag [#allocation4], 1
    %10 = vsyncpa %s9, 0
    %11 = vsyncpa [#allocation5], 0
    %s12 = scalar_lea.sflag [#allocation5], 1
    %13 = vsyncpa %s12, 0
    loop: start=0, step=1, limit=4
    $region2: #{tpu_custom_call.1} parent=1 // loop_pre_header
      _
    $region3: #{tpu_custom_call.1} parent=1 // loop_header
      %s15 = sphi 0, %s19
      %p16 = scmp.ge.s32.totalorder %s15, 4
      %s22 = sphi 0, %s41
      %s23 = sphi 0, %s37
      %s24 = sphi 0, %s33
      %s25 = sphi 0, %s22
      %s26 = sphi 0, %s23
      %s27 = sphi 0, %s24
      %s28 = sphi 0, %s25
      %s29 = sphi 0, %s26
      %s30 = sphi 0, %s27
      %s44 = sphi 0, %s46
      %s47 = sphi 0, %s44
      %s48 = sphi 0, %s47
      %s64 = sphi 0, %s48
      %s70 = sphi 0, %s72
      %s73 = sphi 0, %s70
      %s74 = sphi 0, %s73
      %s90 = sphi 0, %s74
      %s96 = sphi 0, %s98
      %s99 = sphi 0, %s96
      %s100 = sphi 0, %s99
      %s116 = sphi 0, %s100
      %s126 = sphi 0, %s128
      %s129 = sphi 0, %s126
      %s130 = sphi 0, %s129
      %s146 = sphi 0, %s130
    $region4: #{tpu_custom_call.1} parent=1 // loop_header_branch
      %18 = sbr.rel (%p16) target = $region8
    $region5: #{tpu_custom_call.1} parent=1 // loop_body
      %s20 = ssub.s32 %s15, 1
      %s21 = ssub.s32 %s15, 2
      %s31 = sadd.s32 1, %s24
      %p32 = scmp.ge.s32.totalorder %s31, 1
      %s33 = scalar_select %p32, 0, %s31
      %s34 = sadd.s32 1, %s23
      %s35 = scalar_select %p32, %s34, %s23
      %p36 = scmp.ge.s32.totalorder %s35, 1
      %s37 = scalar_select %p36, 0, %s35
      %s38 = sadd.s32 1, %s22
      %s39 = scalar_select %p36, %s38, %s22
      %p40 = scmp.ge.s32.totalorder %s39, 2
      %s41 = scalar_select %p40, 0, %s39
      %s42 = ssub.s32 %s22, %s41
      %p43 = scmp.eq.s32.totalorder %s42, 0
      %s45 = sadd.s32 %s44, 1
      %s46 = scalar_select %p43, %s44, %s45
      %p49 = pneg %p43
      %p50 = scmp.eq.s32.totalorder %s15, 1
      %p51 = por %p49, %p50
      %p52 = scmp.ne.s32.totalorder %s44, %s47
      %p53 = scmp.eq.s32.totalorder %s15, 0
      %p54 = por %p52, %p53
      %p55 = scmp.ne.s32.totalorder %s44, %s47
      %p56 = scmp.eq.s32.totalorder %s20, 1
      %p57 = por %p55, %p56
      %p58 = scmp.ne.s32.totalorder %s47, %s48
      %p59 = scmp.eq.s32.totalorder %s20, 0
      %p60 = por %p58, %p59
      %p61 = scmp.ne.s32.totalorder %s47, %s48
      %p62 = scmp.eq.s32.totalorder %s21, 1
      %p63 = por %p61, %p62
      %p65 = scmp.ne.s32.totalorder %s48, %s64
      %p66 = scmp.eq.s32.totalorder %s21, 0
      %p67 = por %p65, %p66
      %s68 = ssub.s32 %s24, %s33
      %p69 = scmp.eq.s32.totalorder %s68, 0
      %s71 = sadd.s32 %s70, 1
      %s72 = scalar_select %p69, %s70, %s71
      %p75 = pneg %p69
      %p76 = scmp.eq.s32.totalorder %s15, 1
      %p77 = por %p75, %p76
      %p78 = scmp.ne.s32.totalorder %s70, %s73
      %p79 = scmp.eq.s32.totalorder %s15, 0
      %p80 = por %p78, %p79
      %p81 = scmp.ne.s32.totalorder %s70, %s73
      %p82 = scmp.eq.s32.totalorder %s20, 1
      %p83 = por %p81, %p82
      %p84 = scmp.ne.s32.totalorder %s73, %s74
      %p85 = scmp.eq.s32.totalorder %s20, 0
      %p86 = por %p84, %p85
      %p87 = scmp.ne.s32.totalorder %s73, %s74
      %p88 = scmp.eq.s32.totalorder %s21, 1
      %p89 = por %p87, %p88
      %p91 = scmp.ne.s32.totalorder %s74, %s90
      %p92 = scmp.eq.s32.totalorder %s21, 0
      %p93 = por %p91, %p92
      %s94 = ssub.s32 %s24, %s33
      %p95 = scmp.eq.s32.totalorder %s94, 0
      %s97 = sadd.s32 %s96, 1
      %s98 = scalar_select %p95, %s96, %s97
      %p101 = pneg %p95
      %p102 = scmp.eq.s32.totalorder %s15, 1
      %p103 = por %p101, %p102
      %p104 = scmp.ne.s32.totalorder %s96, %s99
      %p105 = scmp.eq.s32.totalorder %s15, 0
      %p106 = por %p104, %p105
      %p107 = scmp.ne.s32.totalorder %s96, %s99
      %p108 = scmp.eq.s32.totalorder %s20, 1
      %p109 = por %p107, %p108
      %p110 = scmp.ne.s32.totalorder %s99, %s100
      %p111 = scmp.eq.s32.totalorder %s20, 0
      %p112 = por %p110, %p111
      %p113 = scmp.ne.s32.totalorder %s99, %s100
      %p114 = scmp.eq.s32.totalorder %s21, 1
      %p115 = por %p113, %p114
      %p117 = scmp.ne.s32.totalorder %s100, %s116
      %p118 = scmp.eq.s32.totalorder %s21, 0
      %p119 = por %p117, %p118
      %s120 = ssub.s32 %s22, %s41
      %s121 = ssub.s32 %s24, %s33
      %s122 = sor.u32 %s120, %s121
      %s123 = ssub.s32 %s23, %s37
      %s124 = sor.u32 %s122, %s123
      %p125 = scmp.eq.s32.totalorder %s124, 0
      %s127 = sadd.s32 %s126, 1
      %s128 = scalar_select %p125, %s126, %s127
      %p131 = pneg %p125
      %p132 = scmp.eq.s32.totalorder %s15, 1
      %p133 = por %p131, %p132
      %p134 = scmp.ne.s32.totalorder %s126, %s129
      %p135 = scmp.eq.s32.totalorder %s15, 0
      %p136 = por %p134, %p135
      %p137 = scmp.ne.s32.totalorder %s126, %s129
      %p138 = scmp.eq.s32.totalorder %s20, 1
      %p139 = por %p137, %p138
      %p140 = scmp.ne.s32.totalorder %s129, %s130
      %p141 = scmp.eq.s32.totalorder %s20, 0
      %p142 = por %p140, %p141
      %p143 = scmp.ne.s32.totalorder %s129, %s130
      %p144 = scmp.eq.s32.totalorder %s21, 1
      %p145 = por %p143, %p144
      %p147 = scmp.ne.s32.totalorder %s130, %s146
      %p148 = scmp.eq.s32.totalorder %s21, 0
      %p149 = por %p147, %p148
      %p150 = scmp.le.s32.totalorder 1, %s15
      %p151 = scmp.lt.s32.totalorder %s15, 3
      %p152 = pnand %p150, %p151
      %p153 = pneg %p152
      // Predicated region
      $region9: #{tpu_custom_call.1} parent=5 // pred_check
        _
      $region10: #{tpu_custom_call.1} parent=5 // pred_check_branch
        %155 = sbr.rel (%p152) target = $region12
      $region11: #{tpu_custom_call.1} parent=5 // pred_region
        %s156 = ssub.s32 %s15, 1
        // Predicated region
        $region13: #{tpu_custom_call.1} parent=11 // pred_check
          %p157 = pneg %p86
        $region14: #{tpu_custom_call.1} parent=11 // pred_check_branch
          %159 = sbr.rel (%p157) target = $region16
        $region15: #{tpu_custom_call.1} parent=11 // pred_region
          %p160 = scmp.lt.s32.totalorder %s27, 0
          %s161 = scalar_select %p160, %s27, 0
          %s162 = smul.addr %s161, 4
          %s163 = scalar_lea.vmem %s1, %s162
        $region16: #{tpu_custom_call.1} parent=11 // pred_fallthru
          _
        // Predicated region
        $region17: #{tpu_custom_call.1} parent=11 // pred_check
          %p164 = pneg %p112
        $region18: #{tpu_custom_call.1} parent=11 // pred_check_branch
          %166 = sbr.rel (%p164) target = $region20
        $region19: #{tpu_custom_call.1} parent=11 // pred_region
          %p167 = scmp.lt.s32.totalorder %s27, 0
          %s168 = scalar_select %p167, %s27, 0
          %s169 = smul.addr %s168, 8
          %s170 = scalar_lea.vmem %s2, %s169
        $region20: #{tpu_custom_call.1} parent=11 // pred_fallthru
          _
      $region12: #{tpu_custom_call.1} parent=5 // pred_fallthru
        _
      %p171 = scmp.lt.s32.totalorder %s15, 2
      // Predicated region
      $region21: #{tpu_custom_call.1} parent=5 // pred_check
        %p172 = pneg %p171
      $region22: #{tpu_custom_call.1} parent=5 // pred_check_branch
        %174 = sbr.rel (%p172) target = $region24
      $region23: #{tpu_custom_call.1} parent=5 // pred_region
        // Predicated region
        $region25: #{tpu_custom_call.1} parent=23 // pred_check
          %p175 = pneg %p54
        $region26: #{tpu_custom_call.1} parent=23 // pred_check_branch
          %177 = sbr.rel (%p175) target = $region28
        $region27: #{tpu_custom_call.1} parent=23 // pred_region
          %s178 = sand.u32 %s44, 1
          %s179 = scalar_lea.sflag [#allocation4], %s178
          %s180 = sand.u32 %s44, 1
          %s181 = smul.addr %s180, 8
          %s182 = scalar_lea.vmem [#allocation3], %s181
          %s184 = ssub.s32 128, 128
          %185 = vsyncadd %s179, %s184
          %s186 = smul.addr %s22, 4
          %s187 = smul.addr %s186, 32
          %s188 = scalar_lea.hbm %s0, %s187
          %s190 = sshll.u32 %s182, 4
          %s191 = int_to_ptr.vmem [resolvable:$true] %s190
          %193 = dma.hbm_to_vmem [thread:$0]  %s188, 128, %s191, %s179
        $region28: #{tpu_custom_call.1} parent=23 // pred_fallthru
          _
      $region24: #{tpu_custom_call.1} parent=5 // pred_fallthru
        _
      %p194 = scmp.le.s32.totalorder 1, %s15
      %p195 = scmp.lt.s32.totalorder %s15, 3
      %p196 = pnand %p194, %p195
      %p197 = pneg %p196
      // Predicated region
      $region29: #{tpu_custom_call.1} parent=5 // pred_check
        _
      $region30: #{tpu_custom_call.1} parent=5 // pred_check_branch
        %199 = sbr.rel (%p196) target = $region32
      $region31: #{tpu_custom_call.1} parent=5 // pred_region
        %s200 = ssub.s32 %s15, 1
        %s201 = sand.u32 %s47, 1
        %s202 = scalar_lea.sflag [#allocation4], %s201
        %s203 = sand.u32 %s47, 1
        %s204 = smul.addr %s203, 8
        %s205 = scalar_lea.vmem [#allocation3], %s204
        // Predicated region
        $region33: #{tpu_custom_call.1} parent=31 // pred_check
          %p206 = pneg %p60
        $region34: #{tpu_custom_call.1} parent=31 // pred_check_branch
          %208 = sbr.rel (%p206) target = $region36
        $region35: #{tpu_custom_call.1} parent=31 // pred_region
          %209 = dma.done %s202, 128
        $region36: #{tpu_custom_call.1} parent=31 // pred_fallthru
          _
        %s210 = sand.u32 %s47, 1
        %s211 = scalar_lea.sflag [#allocation4], %s210
        %s212 = sand.u32 %s47, 1
        %s213 = smul.addr %s212, 8
        %s214 = scalar_lea.vmem [#allocation3], %s213
        %p215 = pneg %p60
        %p216 = pneg %p57
        %p217 = scmp.lt.s32.totalorder %s27, 0
        %s218 = scalar_select %p217, %s27, 0
        %s219 = smul.addr %s218, 4
        %s220 = scalar_lea.vmem %s1, %s219
        %p221 = pneg %p86
        %p222 = pneg %p83
        %p223 = scmp.lt.s32.totalorder %s27, 0
        %s224 = scalar_select %p223, %s27, 0
        %s225 = smul.addr %s224, 8
        %s226 = scalar_lea.vmem %s2, %s225
        %p227 = pneg %p112
        %p228 = pneg %p109
        %p229 = pneg %p142
        %p230 = pneg %p139
        %s231 = sand.u32 %s129, 1
        %s232 = scalar_lea.sflag [#allocation5], %s231
        %s233 = sand.u32 %s129, 1
        %s234 = smul.addr %s233, 24
        %s235 = scalar_lea.vmem [#allocation6], %s234
        %p236 = scmp.lt.s32.totalorder %s27, 0
        %s237 = scalar_select %p236, %s27, 0
        %s238 = smul.addr %s237, 4
        %s239 = scalar_lea.vmem %s1, %s238
        %p240 = scmp.lt.s32.totalorder %s27, 0
        %s241 = scalar_select %p240, %s27, 0
        %s242 = smul.addr %s241, 8
        %s243 = scalar_lea.vmem %s2, %s242
        %s244 = smul.u32 3, %s26
        %246 = vst [vmem:[#allocation2 + $0x30] sm:$0xfc] 0
        %247 = vst [vmem:[#allocation2 + $0x38] sm:$0xfc] 0
        %248 = vst [vmem:[#allocation2 + $0x40] sm:$0xfc] 0
        %v249 = vld [vmem:[%s205] sm:$0x3f]
        %v251 = vcombine.high %v249, %v249
        %v253 = vunpack.c.l.s4 1983009808
        %v254 = vunpack.c.0.s8 %v253
        %v255 = vlaneseq
        %v256 = vshrl.u32 %v255, 7
        %v257 = vsub.s32 %v254, %v256
        %v258 = vrot.slane %v249, %v257
        %v260 = vunpack.c.l.s4 1983009808
        %v261 = vunpack.c.0.s8 %v260
        %v262 = vlaneseq
        %v263 = vshrl.u32 %v262, 7
        %v264 = vsub.s32 %v261, %v263
        %v265 = vrot.slane %v251, %v264
        %v266 = vcombine.high %v258, %v258
        %270 = vst [vmem:[#allocation2] sm:$0x3] %v258
        %271 = vst [vmem:[#allocation2 + $0x8] sm:$0x3] %v266
        %272 = vst [vmem:[#allocation2 + $0x10] sm:$0x3] %v265
        %v273 = vld [vmem:[%s205] sm:$0xff]
        %v275 = vcombine.low %v273, %v273
        %v277 = vunpack.c.l.s4 1983009808
        %v278 = vunpack.c.0.s8 %v277
        %v279 = vlaneseq
        %v280 = vshrl.u32 %v279, 7
        %v281 = vsub.s32 %v278, %v280
        %v282 = vrot.slane %v275, %v281
        %v284 = vunpack.c.l.s4 1983009808
        %v285 = vunpack.c.0.s8 %v284
        %v286 = vlaneseq
        %v287 = vshrl.u32 %v286, 7
        %v288 = vsub.s32 %v285, %v287
        %v289 = vrot.slane %v273, %v288
        %v290 = vcombine.high %v282, %v282
        %v291 = vcombine.high %v289, %v289
        %292 = vrot.lane.b32.xlu0 %v282, 127
        %v293 = vpop.permute.xlu0 %292
        %294 = vrot.lane.b32.xlu0 %v290, 127
        %v295 = vpop.permute.xlu0 %294
        %296 = vrot.lane.b32.xlu0 %v289, 127
        %v297 = vpop.permute.xlu0 %296
        %298 = vrot.lane.b32.xlu0 %v291, 127
        %v299 = vpop.permute.xlu0 %298
        %vm300 = vcmask 1039360
        %v301 = vsel %vm300, %v293, %v295
        %v302 = vsel %vm300, %v295, %v297
        %v303 = vsel %vm300, %v297, %v299
        %307 = vst [vmem:[#allocation2] sm:$0xc] %v301
        %308 = vst [vmem:[#allocation2 + $0x8] sm:$0xc] %v302
        %309 = vst [vmem:[#allocation2 + $0x10] sm:$0xc] %v303
        %v310 = vld [vmem:[%s205] sm:$0xff]
        %v312 = vcombine.high %v310, %v310
        %v314 = vunpack.c.l.s4 1983009808
        %v315 = vunpack.c.0.s8 %v314
        %v316 = vlaneseq
        %v317 = vshrl.u32 %v316, 7
        %v318 = vsub.s32 %v315, %v317
        %v319 = vrot.slane %v310, %v318
        %v321 = vunpack.c.l.s4 1983009808
        %v322 = vunpack.c.0.s8 %v321
        %v323 = vlaneseq
        %v324 = vshrl.u32 %v323, 7
        %v325 = vsub.s32 %v322, %v324
        %v326 = vrot.slane %v312, %v325
        %v327 = vcombine.low %v319, %v319
        %v328 = vcombine.low %v326, %v326
        %329 = vrot.lane.b32.xlu0 %v327, 126
        %v330 = vpop.permute.xlu0 %329
        %331 = vrot.lane.b32.xlu0 %v319, 126
        %v332 = vpop.permute.xlu0 %331
        %333 = vrot.lane.b32.xlu0 %v328, 126
        %v334 = vpop.permute.xlu0 %333
        %335 = vrot.lane.b32.xlu0 %v326, 126
        %v336 = vpop.permute.xlu0 %335
        %vm337 = vcmask 1031168
        %v338 = vsel %vm337, %v330, %v332
        %v339 = vsel %vm337, %v332, %v334
        %v340 = vsel %vm337, %v334, %v336
        %344 = vst [vmem:[#allocation2] sm:$0x30] %v338
        %345 = vst [vmem:[#allocation2 + $0x8] sm:$0x30] %v339
        %346 = vst [vmem:[#allocation2 + $0x10] sm:$0x30] %v340
        %v347 = vld [vmem:[%s205] sm:$0xff]
        %v349 = vcombine.low %v347, %v347
        %v351 = vunpack.c.l.s4 1983009808
        %v352 = vunpack.c.0.s8 %v351
        %v353 = vlaneseq
        %v354 = vshrl.u32 %v353, 7
        %v355 = vsub.s32 %v352, %v354
        %v356 = vrot.slane %v349, %v355
        %v358 = vunpack.c.l.s4 1983009808
        %v359 = vunpack.c.0.s8 %v358
        %v360 = vlaneseq
        %v361 = vshrl.u32 %v360, 7
        %v362 = vsub.s32 %v359, %v361
        %v363 = vrot.slane %v347, %v362
        %v364 = vcombine.low %v356, %v356
        %v365 = vcombine.low %v363, %v363
        %366 = vrot.lane.b32.xlu0 %v364, 110
        %v367 = vpop.permute.xlu0 %366
        %368 = vrot.lane.b32.xlu0 %v356, 110
        %v369 = vpop.permute.xlu0 %368
        %370 = vrot.lane.b32.xlu0 %v365, 110
        %v371 = vpop.permute.xlu0 %370
        %372 = vrot.lane.b32.xlu0 %v363, 110
        %v373 = vpop.permute.xlu0 %372
        %vm374 = vcmask 900096
        %v375 = vsel %vm374, %v367, %v369
        %v376 = vsel %vm374, %v369, %v371
        %v377 = vsel %vm374, %v371, %v373
        %381 = vst [vmem:[#allocation2] sm:$0xc0] %v375
        %382 = vst [vmem:[#allocation2 + $0x8] sm:$0xc0] %v376
        %383 = vst [vmem:[#allocation2 + $0x10] sm:$0xc0] %v377
        %v384 = vld [vmem:[%s205] sm:$0xff]
        %v386 = vcombine.high %v384, %v384
        %v388 = vunpack.c.l.s4 1983009808
        %v389 = vunpack.c.0.s8 %v388
        %v390 = vlaneseq
        %v391 = vshrl.u32 %v390, 7
        %v392 = vsub.s32 %v389, %v391
        %v393 = vrot.slane %v384, %v392
        %v395 = vunpack.c.l.s4 1983009808
        %v396 = vunpack.c.0.s8 %v395
        %v397 = vlaneseq
        %v398 = vshrl.u32 %v397, 7
        %v399 = vsub.s32 %v396, %v398
        %v400 = vrot.slane %v386, %v399
        %v401 = vcombine.high %v393, %v393
        %v402 = vcombine.high %v400, %v400
        %403 = vrot.lane.b32.xlu0 %v393, 109
        %v404 = vpop.permute.xlu0 %403
        %405 = vrot.lane.b32.xlu0 %v401, 109
        %v406 = vpop.permute.xlu0 %405
        %407 = vrot.lane.b32.xlu0 %v400, 109
        %v408 = vpop.permute.xlu0 %407
        %409 = vrot.lane.b32.xlu0 %v402, 109
        %v410 = vpop.permute.xlu0 %409
        %vm411 = vcmask 891904
        %v412 = vsel %vm411, %v404, %v406
        %v413 = vsel %vm411, %v406, %v408
        %v414 = vsel %vm411, %v408, %v410
        %418 = vst [vmem:[#allocation2 + $0x18] sm:$0x3] %v412
        %419 = vst [vmem:[#allocation2 + $0x20] sm:$0x3] %v413
        %420 = vst [vmem:[#allocation2 + $0x28] sm:$0x3] %v414
        %v421 = vld [vmem:[%s205] sm:$0xff]
        %v423 = vcombine.low %v421, %v421
        %v425 = vunpack.c.l.s4 1983009808
        %v426 = vunpack.c.0.s8 %v425
        %v427 = vlaneseq
        %v428 = vshrl.u32 %v427, 7
        %v429 = vsub.s32 %v426, %v428
        %v430 = vrot.slane %v423, %v429
        %v432 = vunpack.c.l.s4 1983009808
        %v433 = vunpack.c.0.s8 %v432
        %v434 = vlaneseq
        %v435 = vshrl.u32 %v434, 7
        %v436 = vsub.s32 %v433, %v435
        %v437 = vrot.slane %v421, %v436
        %v438 = vcombine.high %v430, %v430
        %v439 = vcombine.high %v437, %v437
        %440 = vrot.lane.b32.xlu0 %v430, 108
        %v441 = vpop.permute.xlu0 %440
        %442 = vrot.lane.b32.xlu0 %v438, 108
        %v443 = vpop.permute.xlu0 %442
        %444 = vrot.lane.b32.xlu0 %v437, 108
        %v445 = vpop.permute.xlu0 %444
        %446 = vrot.lane.b32.xlu0 %v439, 108
        %v447 = vpop.permute.xlu0 %446
        %vm448 = vcmask 883712
        %v449 = vsel %vm448, %v441, %v443
        %v450 = vsel %vm448, %v443, %v445
        %v451 = vsel %vm448, %v445, %v447
        %455 = vst [vmem:[#allocation2 + $0x18] sm:$0xc] %v449
        %456 = vst [vmem:[#allocation2 + $0x20] sm:$0xc] %v450
        %457 = vst [vmem:[#allocation2 + $0x28] sm:$0xc] %v451
        %v458 = vld [vmem:[%s205] sm:$0xff]
        %v460 = vcombine.high %v458, %v458
        %v462 = vunpack.c.l.s4 1983009808
        %v463 = vunpack.c.0.s8 %v462
        %v464 = vlaneseq
        %v465 = vshrl.u32 %v464, 7
        %v466 = vsub.s32 %v463, %v465
        %v467 = vrot.slane %v458, %v466
        %v469 = vunpack.c.l.s4 1983009808
        %v470 = vunpack.c.0.s8 %v469
        %v471 = vlaneseq
        %v472 = vshrl.u32 %v471, 7
        %v473 = vsub.s32 %v470, %v472
        %v474 = vrot.slane %v460, %v473
        %v475 = vcombine.low %v467, %v467
        %v476 = vcombine.low %v474, %v474
        %477 = vrot.lane.b32.xlu0 %v475, 92
        %v478 = vpop.permute.xlu0 %477
        %479 = vrot.lane.b32.xlu0 %v467, 92
        %v480 = vpop.permute.xlu0 %479
        %481 = vrot.lane.b32.xlu0 %v476, 92
        %v482 = vpop.permute.xlu0 %481
        %483 = vrot.lane.b32.xlu0 %v474, 92
        %v484 = vpop.permute.xlu0 %483
        %vm485 = vcmask 752640
        %v486 = vsel %vm485, %v478, %v480
        %v487 = vsel %vm485, %v480, %v482
        %v488 = vsel %vm485, %v482, %v484
        %492 = vst [vmem:[#allocation2 + $0x18] sm:$0x30] %v486
        %493 = vst [vmem:[#allocation2 + $0x20] sm:$0x30] %v487
        %494 = vst [vmem:[#allocation2 + $0x28] sm:$0x30] %v488
        %v495 = vld [vmem:[%s205] sm:$0xff]
        %v497 = vcombine.low %v495, %v495
        %v499 = vunpack.c.l.s4 1983009808
        %v500 = vunpack.c.0.s8 %v499
        %v501 = vlaneseq
        %v502 = vshrl.u32 %v501, 7
        %v503 = vsub.s32 %v500, %v502
        %v504 = vrot.slane %v497, %v503
        %v506 = vunpack.c.l.s4 1983009808
        %v507 = vunpack.c.0.s8 %v506
        %v508 = vlaneseq
        %v509 = vshrl.u32 %v508, 7
        %v510 = vsub.s32 %v507, %v509
        %v511 = vrot.slane %v495, %v510
        %v512 = vcombine.low %v504, %v504
        %v513 = vcombine.low %v511, %v511
        %514 = vrot.lane.b32.xlu0 %v512, 91
        %v515 = vpop.permute.xlu0 %514
        %516 = vrot.lane.b32.xlu0 %v504, 91
        %v517 = vpop.permute.xlu0 %516
        %518 = vrot.lane.b32.xlu0 %v513, 91
        %v519 = vpop.permute.xlu0 %518
        %520 = vrot.lane.b32.xlu0 %v511, 91
        %v521 = vpop.permute.xlu0 %520
        %vm522 = vcmask 744448
        %v523 = vsel %vm522, %v515, %v517
        %v524 = vsel %vm522, %v517, %v519
        %v525 = vsel %vm522, %v519, %v521
        %529 = vst [vmem:[#allocation2 + $0x18] sm:$0xc0] %v523
        %530 = vst [vmem:[#allocation2 + $0x20] sm:$0xc0] %v524
        %531 = vst [vmem:[#allocation2 + $0x28] sm:$0xc0] %v525
        %v532 = vld [vmem:[%s205] sm:$0xff]
        %v534 = vcombine.high %v532, %v532
        %v536 = vunpack.c.l.s4 1983009808
        %v537 = vunpack.c.0.s8 %v536
        %v538 = vlaneseq
        %v539 = vshrl.u32 %v538, 7
        %v540 = vsub.s32 %v537, %v539
        %v541 = vrot.slane %v532, %v540
        %v543 = vunpack.c.l.s4 1983009808
        %v544 = vunpack.c.0.s8 %v543
        %v545 = vlaneseq
        %v546 = vshrl.u32 %v545, 7
        %v547 = vsub.s32 %v544, %v546
        %v548 = vrot.slane %v534, %v547
        %v549 = vcombine.high %v541, %v541
        %v550 = vcombine.high %v548, %v548
        %551 = vrot.lane.b32.xlu0 %v541, 90
        %v552 = vpop.permute.xlu0 %551
        %553 = vrot.lane.b32.xlu0 %v549, 90
        %v554 = vpop.permute.xlu0 %553
        %555 = vrot.lane.b32.xlu0 %v548, 90
        %v556 = vpop.permute.xlu0 %555
        %557 = vrot.lane.b32.xlu0 %v550, 90
        %v558 = vpop.permute.xlu0 %557
        %vm559 = vcmask 736256
        %v560 = vsel %vm559, %v552, %v554
        %v561 = vsel %vm559, %v554, %v556
        %v562 = vsel %vm559, %v556, %v558
        %566 = vst [vmem:[#allocation2 + $0x30] sm:$0x3] %v560
        %567 = vst [vmem:[#allocation2 + $0x38] sm:$0x3] %v561
        %568 = vst [vmem:[#allocation2 + $0x40] sm:$0x3] %v562
        %v569 = vld [vmem:[%s239] sm:$0xf]
        %v570 = vld [vmem:[#allocation2] sm:$0xff]
        %v571 = vld [vmem:[#allocation2 + $0x8] sm:$0xff]
        %v572 = vld [vmem:[#allocation2 + $0x10] sm:$0xff]
        %v573 = vld [vmem:[#allocation2 + $0x18] sm:$0xff]
        %v574 = vld [vmem:[#allocation2 + $0x20] sm:$0xff]
        %v575 = vld [vmem:[#allocation2 + $0x28] sm:$0xff]
        %v576 = vld [vmem:[#allocation2 + $0x30] sm:$0xff]
        %v577 = vld [vmem:[#allocation2 + $0x38] sm:$0xff]
        %v578 = vld [vmem:[#allocation2 + $0x40] sm:$0xff]
        %v579 = vld [vmem:[%s243] sm:$0xff]
        %581 = vset.pattern.permute.xlu0 0
        %582 = vperm.xlu0 %581, %v579
        %v583 = vpop.permute.xlu0 %582
        %vm585 = vcmask 392192
        %v587 = vsel %vm585, %v569, 0
        %589 = vmatprep.subr.bf16.mxu0 %v571
        %590 = vmatpush1.bf16.msra.mxu0 %v570
        %591 = vmatprep.subr.bf16.mxu0 %v574
        %592 = vmatpush1.bf16.msra.mxu0 %v573
        %593 = vmatprep.subr.bf16.mxu0 %v577
        %594 = vmatpush1.bf16.msra.mxu0 %v576
        %595 = vmatprep.subr.bf16.mxu0 0
        %596 = vmatpush1.bf16.msra.mxu0 0
        %597 = vmatprep.subr.bf16.mxu0 0
        %598 = vmatpush1.bf16.msra.mxu0 0
        %599 = vmatprep.subr.bf16.mxu0 0
        %600 = vmatpush1.bf16.msra.mxu0 0
        %601 = vmatprep.subr.bf16.mxu0 0
        %602 = vmatpush1.bf16.msra.mxu0 0
        %603 = vmatprep.subr.bf16.mxu0 0
        %604 = vmatpush1.bf16.msra.mxu0 0
        %605 = vmatprep.subr.bf16.mxu0 0
        %606 = vmatpush1.bf16.msra.mxu0 0
        %607 = vmatprep.subr.bf16.mxu0 0
        %608 = vmatpush1.bf16.msra.mxu0 0
        %609 = vmatprep.subr.bf16.mxu0 0
        %610 = vmatpush1.bf16.msra.mxu0 0
        %611 = vmatprep.subr.bf16.mxu0 0
        %612 = vmatpush1.bf16.msra.mxu0 0
        %613 = vmatprep.subr.bf16.mxu0 0
        %614 = vmatpush1.bf16.msra.mxu0 0
        %615 = vmatprep.subr.bf16.mxu0 0
        %616 = vmatpush1.bf16.msra.mxu0 0
        %617 = vmatprep.subr.bf16.mxu0 0
        %618 = vmatpush1.bf16.msra.mxu0 0
        %619 = vmatprep.subr.bf16.mxu0 0
        %620 = vmatpush1.bf16.msra.mxu0 0
        %621 = vmatprep.mubr.bf16.mxu0 0
        %622 = vmatmul.mubr.bf16.gmra.mrb[0].mxu0 %v587
        %v623 = vpop.f32.mrb[0].mxu0
        %v624 = vadd.f32 %v583, %v623
        %v625 = vpop.f32.mrb[0].mxu0
        %v626 = vadd.f32 %v583, %v625
        %v627 = vpop.f32.mrb[0].mxu0
        %v628 = vpop.f32.mrb[0].mxu0
        %629 = vdwg.mxu0
        %630 = vmatprep.subr.bf16.mxu0 0
        %631 = vmatpush1.bf16.msra.mxu0 %v572
        %632 = vmatprep.subr.bf16.mxu0 0
        %633 = vmatpush1.bf16.msra.mxu0 %v575
        %634 = vmatprep.subr.bf16.mxu0 0
        %635 = vmatpush1.bf16.msra.mxu0 %v578
        %636 = vmatprep.subr.bf16.mxu0 0
        %637 = vmatpush1.bf16.msra.mxu0 0
        %638 = vmatprep.subr.bf16.mxu0 0
        %639 = vmatpush1.bf16.msra.mxu0 0
        %640 = vmatprep.subr.bf16.mxu0 0
        %641 = vmatpush1.bf16.msra.mxu0 0
        %642 = vmatprep.subr.bf16.mxu0 0
        %643 = vmatpush1.bf16.msra.mxu0 0
        %644 = vmatprep.subr.bf16.mxu0 0
        %645 = vmatpush1.bf16.msra.mxu0 0
        %646 = vmatprep.subr.bf16.mxu0 0
        %647 = vmatpush1.bf16.msra.mxu0 0
        %648 = vmatprep.subr.bf16.mxu0 0
        %649 = vmatpush1.bf16.msra.mxu0 0
        %650 = vmatprep.subr.bf16.mxu0 0
        %651 = vmatpush1.bf16.msra.mxu0 0
        %652 = vmatprep.subr.bf16.mxu0 0
        %653 = vmatpush1.bf16.msra.mxu0 0
        %654 = vmatprep.subr.bf16.mxu0 0
        %655 = vmatpush1.bf16.msra.mxu0 0
        %656 = vmatprep.subr.bf16.mxu0 0
        %657 = vmatpush1.bf16.msra.mxu0 0
        %658 = vmatprep.subr.bf16.mxu0 0
        %659 = vmatpush1.bf16.msra.mxu0 0
        %660 = vmatprep.subr.bf16.mxu0 0
        %661 = vmatpush1.bf16.msra.mxu0 0
        %662 = vmatprep.mubr.bf16.mxu0 0
        %663 = vmatmul.mubr.bf16.gmra.mrb[0].mxu0 %v587
        %v664 = vpop.f32.mrb[0].mxu0
        %v665 = vadd.f32 %v583, %v664
        %v666 = vpop.f32.mrb[0].mxu0
        %v667 = vpop.f32.mrb[0].mxu0
        %v668 = vpop.f32.mrb[0].mxu0
        %669 = vdwg.mxu0
        %670 = vst [vmem:[%s235] sm:$0xff] %v624
        %671 = vst [vmem:[%s235 + $0x8] sm:$0xff] %v626
        %672 = vst [vmem:[%s235 + $0x10] sm:$0xff] %v665
        %s673 = sand.u32 %s129, 1
        %s674 = scalar_lea.sflag [#allocation5], %s673
        %s675 = sand.u32 %s129, 1
        %s676 = smul.addr %s675, 24
        %s677 = scalar_lea.vmem [#allocation6], %s676
        // Predicated region
        $region37: #{tpu_custom_call.1} parent=31 // pred_check
          %p678 = pneg %p139
        $region38: #{tpu_custom_call.1} parent=31 // pred_check_branch
          %680 = sbr.rel (%p678) target = $region40
        $region39: #{tpu_custom_call.1} parent=31 // pred_region
          %s681 = smul.u32 3, %s26
          %s683 = ssub.s32 384, 384
          %684 = vsyncadd %s674, %s683
          %s685 = smul.addr %s27, 3
          %s686 = sadd.s32 %s681, %s685
          %s687 = smul.addr %s25, 3
          %s688 = sadd.s32 %s686, %s687
          %s689 = smul.addr %s688, 128
          %s690 = scalar_lea.hbm %s3, %s689
          %s692 = sshll.u32 %s677, 4
          %s693 = int_to_ptr.vmem [resolvable:$true] %s692
          %695 = dma.vmem_to_hbm [thread:$0]  %s693, 384, %s690, %s674
        $region40: #{tpu_custom_call.1} parent=31 // pred_fallthru
          _
      $region32: #{tpu_custom_call.1} parent=5 // pred_fallthru
        _
      %p696 = scmp.le.s32.totalorder 2, %s15
      // Predicated region
      $region41: #{tpu_custom_call.1} parent=5 // pred_check
        %p697 = pneg %p696
      $region42: #{tpu_custom_call.1} parent=5 // pred_check_branch
        %699 = sbr.rel (%p697) target = $region44
      $region43: #{tpu_custom_call.1} parent=5 // pred_region
        %s700 = ssub.s32 %s15, 2
        // Predicated region
        $region45: #{tpu_custom_call.1} parent=43 // pred_check
          %p701 = pneg %p145
        $region46: #{tpu_custom_call.1} parent=43 // pred_check_branch
          %703 = sbr.rel (%p701) target = $region48
        $region47: #{tpu_custom_call.1} parent=43 // pred_region
          %s704 = sand.u32 %s130, 1
          %s705 = scalar_lea.sflag [#allocation5], %s704
          %s706 = sand.u32 %s130, 1
          %s707 = smul.addr %s706, 24
          %s708 = scalar_lea.vmem [#allocation6], %s707
          %709 = dma.done %s705, 384
        $region48: #{tpu_custom_call.1} parent=43 // pred_fallthru
          _
      $region44: #{tpu_custom_call.1} parent=5 // pred_fallthru
        _
    $region6: #{tpu_custom_call.1} parent=1 // loop_footer
      %s19 = sadd.s32 1, %s15
    $region7: #{tpu_custom_call.1} parent=1 // loop_footer_branch
      %14 = sbr.rel target = $region3
    $region8: #{tpu_custom_call.1} parent=1 // loop_exit
      _
    %710 = vsyncpa [#allocation4], 1
    %s711 = scalar_lea.sflag [#allocation4], 1
    %712 = vsyncpa %s711, 1
    %713 = vsyncpa [#allocation5], 1
    %s714 = scalar_lea.sflag [#allocation5], 1
    %715 = vsyncpa %s714, 1

</llo_original>
